<compile_context>
chip_gen: v6e
topology: v6e:2x2x1
jax: 0.10.0
libtpu: 0.0.40
codegen_flags: <defaults>
</compile_context>

<pallas_src>
import math

import jax
import jax.numpy as jnp
from jax.experimental import pallas as pl
from jax.experimental.pallas import tpu as pltpu


# ----------------------------------------------------------------------------- helpers
def _cdiv(a, b):
    return -(-a // b)


def _round_up(a, b):
    return _cdiv(a, b) * b


_LANE_CAP = 4096      # maximum folded lane width
_LANE_TARGET = 512    # aim for >= this many lanes per row (wide unmasked vst)


# ----------------------------------------------------------------------------- kernels
def _weighted_bce_elements(x_ref, t_ref, nw_ref, pw_ref):
    """Per-element weighted BCE-with-logits, computed in f32."""
    x = x_ref[...].astype(jnp.float32)     # (tile, L)
    t = t_ref[...].astype(jnp.float32)     # (tile, L)
    nw = nw_ref[...]                       # (1, L) f32, broadcasts over rows
    pw = pw_ref[...]                       # (1, L) f32

    # weights = p if t==1 else (n if t==0 else 0)
    # nested select (1 fewer mul/add pair than the two-mask form); non-{0,1}
    # targets -- including the -1 padding -- get weight 0.
    w = jnp.where(t == 1.0, pw, jnp.where(t == 0.0, nw, 0.0))

    # numerically stable BCE-with-logits (matches the PyTorch formulation)
    per = jnp.maximum(x, 0.0) - x * t + jnp.log1p(jnp.exp(-jnp.abs(x)))
    return w * per


def _wbce_sum_kernel(x_ref, t_ref, nw_ref, pw_ref, out_ref):
    s = jnp.sum(_weighted_bce_elements(x_ref, t_ref, nw_ref, pw_ref))
    # One partial sum per grid block, splatted into a tiling-friendly (1,8,128).
    out_ref[...] = jnp.full(out_ref.shape, s, jnp.float32)


def _wbce_elem_kernel(x_ref, t_ref, nw_ref, pw_ref, out_ref):
    out_ref[...] = _weighted_bce_elements(
        x_ref, t_ref, nw_ref, pw_ref).astype(out_ref.dtype)


# ----------------------------------------------------------------------------- wrapper
def weighted_bce_with_logits(logits, targets, n_weights, p_weights,
                             reduce=True, tile_rows=None,
                             out_dtype=jnp.float32):
    """logits/targets: (N, C); n_weights/p_weights: (C,)."""
    N, C = logits.shape
    total_elems = N * C
    nw = jnp.asarray(n_weights, jnp.float32).reshape(1, C)
    pw = jnp.asarray(p_weights, jnp.float32).reshape(1, C)
    x, t = logits, targets            # keep native dtypes over HBM

    # ---- Lane-densify: fold whole batch rows into a wide lane axis ----------
    lcm = C * (128 // math.gcd(C, 128))
    if lcm <= _LANE_CAP:
        L = lcm
        fold = L // C
        # widen toward >= 512 lanes (but don't fold more rows than we have)
        while L < _LANE_TARGET and L * 2 <= _LANE_CAP and fold * 2 <= max(8, N):
            L *= 2
            fold *= 2
        if fold > 1:
            n_pad = _round_up(N, fold) - N
            if n_pad:
                x = jnp.pad(x, ((0, n_pad), (0, 0)))
                t = jnp.pad(t, ((0, n_pad), (0, 0)), constant_values=-1)
            x = x.reshape(-1, L)
            t = t.reshape(-1, L)
            nw = jnp.tile(nw, (1, fold))
            pw = jnp.tile(pw, (1, fold))
    else:
        # awkward C: pad channels up to a multiple of 128 (weight 0, target -1)
        fold = 1
        L = _round_up(C, 128)
        c_pad = L - C
        if c_pad:
            x = jnp.pad(x, ((0, 0), (0, c_pad)))
            t = jnp.pad(t, ((0, 0), (0, c_pad)), constant_values=-1)
            nw = jnp.pad(nw, ((0, 0), (0, c_pad)))
            pw = jnp.pad(pw, ((0, 0), (0, c_pad)))
    R = x.shape[0]

    # ---- dtype-aware sublane multiple (8 for 4B, 16 for 2B, 32 for 1B) ------
    out_itemsize = jnp.dtype(out_dtype).itemsize
    sub = 8
    dts = [x.dtype, t.dtype] + ([] if reduce else [jnp.dtype(out_dtype)])
    for d in dts:
        sub = max(sub, 32 // jnp.dtype(d).itemsize)

    # ---- generation-aware VMEM budget ---------------------------------------
    try:
        vmem_cap = int(pltpu.get_tpu_info().vmem_capacity_bytes)
    except Exception:
        vmem_cap = 64 << 20                       # conservative (v7x physical)
    vmem_limit = int(min(vmem_cap // 2, 64 << 20))  # 32 MiB v7x, 64 MiB v5e/v6e

    in_bytes_row = L * (x.dtype.itemsize + t.dtype.itemsize)
    out_bytes_row = 0 if reduce else L * out_itemsize
    pipe_bytes_row = 2 * (in_bytes_row + out_bytes_row)   # double-buffered

    # ~4 MiB per input stream, clamped so the pipelined footprint stays under
    # ~70% of the scoped-VMEM limit on every generation.
    tile = (4 << 20) // max(1, L * max(x.dtype.itemsize, t.dtype.itemsize))
    tile = min(tile, int(vmem_limit * 0.7) // max(1, pipe_bytes_row))
    if tile_rows is not None:
        tile = min(tile, tile_rows)
    tile = max(sub, tile // sub * sub)

    if R <= sub:
        tile = R                                   # single tiny block
    else:
        # keep >= 2 grid blocks so the "parallel" axis can shard over v7x's 2 TCs
        tile = max(sub, min(tile, _round_up(_cdiv(R, 2), sub)))

    r_padded = _round_up(R, tile)
    if r_padded != R:
        pad = r_padded - R
        x = jnp.pad(x, ((0, pad), (0, 0)))
        t = jnp.pad(t, ((0, pad), (0, 0)), constant_values=-1)
    grid = r_padded // tile

    in_specs = [
        pl.BlockSpec((tile, L), lambda i: (i, 0)),   # logits tile
        pl.BlockSpec((tile, L), lambda i: (i, 0)),   # targets tile
        pl.BlockSpec((1, L), lambda i: (0, 0)),      # n_weights (resident)
        pl.BlockSpec((1, L), lambda i: (0, 0)),      # p_weights (resident)
    ]
    cparams = pltpu.CompilerParams(
        dimension_semantics=("parallel",),
        vmem_limit_bytes=vmem_limit,
    )
    n_proc = r_padded * L
    cost = pl.CostEstimate(
        flops=8 * n_proc,
        transcendentals=2 * n_proc,
        bytes_accessed=(n_proc * (x.dtype.itemsize + t.dtype.itemsize)
                        + (0 if reduce else n_proc * out_itemsize)),
    )

    if reduce:
        partial = pl.pallas_call(
            _wbce_sum_kernel,
            out_shape=jax.ShapeDtypeStruct((grid, 8, 128), jnp.float32),
            grid=(grid,),
            in_specs=in_specs,
            out_specs=pl.BlockSpec((1, 8, 128), lambda i: (i, 0, 0)),
            compiler_params=cparams,
            cost_estimate=cost,
        )(x, t, nw, pw)
        # Finish the mean outside (divide by the true element count).
        return jnp.sum(partial[:, 0, 0]) / total_elems

    out = pl.pallas_call(
        _wbce_elem_kernel,
        out_shape=jax.ShapeDtypeStruct((r_padded, L), out_dtype),
        grid=(grid,),
        in_specs=in_specs,
        out_specs=pl.BlockSpec((tile, L), lambda i: (i, 0)),
        compiler_params=cparams,
        cost_estimate=cost,
    )(x, t, nw, pw)

    out = out[:R]                          # drop row padding from tiling
    if fold > 1:
        out = out.reshape(R * fold, C)     # undo the lane fold
    return out[:N, :C]                     # drop fold / channel padding


# ----------------------------------------------------------------------------- reference
def _reference(logits, targets, n_weights, p_weights, reduce=True):
    x = logits.astype(jnp.float32)
    t = targets.astype(jnp.float32)
    w = (t == 1.0).astype(jnp.float32) * p_weights + \
        (t == 0.0).astype(jnp.float32) * n_weights
    loss = w * (jnp.maximum(x, 0.0) - x * t + jnp.log1p(jnp.exp(-jnp.abs(x))))
    return jnp.mean(loss) if reduce else loss


# ----------------------------------------------------------------------------- demo / tests
if __name__ == "__main__":
    key = jax.random.PRNGKey(0)

    def run_case(N, C, tile_rows=None):
        k1, k2, k3, k4 = jax.random.split(jax.random.fold_in(key, N * 4096 + C), 4)
        logits = jax.random.normal(k1, (N, C), dtype=jnp.float32)
        targets = jax.random.bernoulli(k2, 0.5, (N, C)).astype(jnp.float32)
        n_weights = jax.random.uniform(k3, (C,), jnp.float32, 0.5, 1.5)
        p_weights = jax.random.uniform(k4, (C,), jnp.float32, 0.5, 1.5)

        out_mean = weighted_bce_with_logits(logits, targets, n_weights,
                                            p_weights, reduce=True,
                                            tile_rows=tile_rows)
        jax.block_until_ready(out_mean)
        ref_mean = _reference(logits, targets, n_weights, p_weights, reduce=True)
        assert jnp.allclose(out_mean, ref_mean, atol=1e-6, rtol=1e-4), (
            f"mean mismatch N={N} C={C}: {out_mean} vs {ref_mean}")

        out_elem = weighted_bce_with_logits(logits, targets, n_weights,
                                            p_weights, reduce=False,
                                            tile_rows=tile_rows)
        jax.block_until_ready(out_elem)
        ref_elem = _reference(logits, targets, n_weights, p_weights, reduce=False)
        assert out_elem.shape == (N, C)
        assert jnp.allclose(out_elem, ref_elem, atol=1e-5, rtol=1e-5), (
            f"elementwise mismatch N={N} C={C}")

    # tiny: lane-folded single block
    run_case(N=8, C=16)
    # multi-block grid + row padding + fold padding (tile_rows forces >1 block)
    run_case(N=260, C=16, tile_rows=8)
    # non-power-of-two C exercising the lcm lane fold (L = 640)
    run_case(N=70, C=10)
    # large awkward C exercising the channel-pad fallback (C padded to 1024)
    run_case(N=20, C=1000)

    print("KERNEL_OK")
</pallas_src>

<mosaic_0001>
module attributes {stable_mosaic.version = 11 : i64} {
  func.func @_wbce_sum_kernel(%arg0: i32, %arg1: memref<1x128xf32, #tpu.memory_space<vmem>>, %arg2: memref<1x128xf32, #tpu.memory_space<vmem>>, %arg3: memref<1x128xf32, #tpu.memory_space<vmem>>, %arg4: memref<1x128xf32, #tpu.memory_space<vmem>>, %arg5: memref<1x8x128xf32, #tpu.memory_space<vmem>>) attributes {dimension_semantics = [#tpu.dimension_semantics<parallel>], iteration_bounds = array<i64: 1>, scalar_prefetch = 0 : i64, scratch_operands = 0 : i64, tpu.core_type = #tpu.core_type<tc>, window_params = [{transform_indices = @transform_0, window_bounds = array<i64: 1, 128>}, {transform_indices = @transform_1, window_bounds = array<i64: 1, 128>}, {pipeline_mode = #tpu.pipeline_mode<synchronous>, transform_indices = @transform_2, window_bounds = array<i64: 1, 128>}, {pipeline_mode = #tpu.pipeline_mode<synchronous>, transform_indices = @transform_3, window_bounds = array<i64: 1, 128>}, {transform_indices = @transform_4, window_bounds = array<i64: 1, 8, 128>}]} {
    %c0 = arith.constant 0 : index
    %c0_0 = arith.constant 0 : index
    %0 = vector.load %arg1[%c0, %c0_0] : memref<1x128xf32, #tpu.memory_space<vmem>>, vector<1x128xf32>
    %c0_1 = arith.constant 0 : index
    %c0_2 = arith.constant 0 : index
    %1 = vector.load %arg2[%c0_1, %c0_2] : memref<1x128xf32, #tpu.memory_space<vmem>>, vector<1x128xf32>
    %c0_3 = arith.constant 0 : index
    %c0_4 = arith.constant 0 : index
    %2 = vector.load %arg3[%c0_3, %c0_4] : memref<1x128xf32, #tpu.memory_space<vmem>>, vector<1x128xf32>
    %c0_5 = arith.constant 0 : index
    %c0_6 = arith.constant 0 : index
    %3 = vector.load %arg4[%c0_5, %c0_6] : memref<1x128xf32, #tpu.memory_space<vmem>>, vector<1x128xf32>
    %cst = arith.constant 1.000000e+00 : f32
    %4 = vector.broadcast %cst : f32 to vector<1x128xf32>
    %5 = arith.cmpf oeq, %1, %4 : vector<1x128xf32>
    %cst_7 = arith.constant 0.000000e+00 : f32
    %6 = vector.broadcast %cst_7 : f32 to vector<1x128xf32>
    %7 = arith.cmpf oeq, %1, %6 : vector<1x128xf32>
    %cst_8 = arith.constant 0.000000e+00 : f32
    %8 = vector.broadcast %cst_8 : f32 to vector<1x128xf32>
    %9 = arith.select %7, %2, %8 : vector<1x128xi1>, vector<1x128xf32>
    %10 = arith.select %5, %3, %9 : vector<1x128xi1>, vector<1x128xf32>
    %cst_9 = arith.constant 0.000000e+00 : f32
    %11 = vector.broadcast %cst_9 : f32 to vector<1x128xf32>
    %12 = arith.maximumf %0, %11 : vector<1x128xf32>
    %13 = arith.mulf %0, %1 : vector<1x128xf32>
    %14 = arith.subf %12, %13 : vector<1x128xf32>
    %15 = math.absf %0 : vector<1x128xf32>
    %cst_10 = arith.constant 0.000000e+00 : f32
    %16 = vector.broadcast %cst_10 : f32 to vector<1x128xf32>
    %17 = arith.subf %16, %15 : vector<1x128xf32>
    %18 = math.exp %17 : vector<1x128xf32>
    %19 = math.log1p %18 : vector<1x128xf32>
    %20 = arith.addf %14, %19 : vector<1x128xf32>
    %21 = arith.mulf %10, %20 : vector<1x128xf32>
    %22 = vector.shape_cast %21 : vector<1x128xf32> to vector<1x1x128xf32>
    %cst_11 = arith.constant dense<0.000000e+00> : vector<1xf32>
    %23 = vector.multi_reduction <add>, %22, %cst_11 [1, 2] : vector<1x1x128xf32> to vector<1xf32>
    %24 = vector.shape_cast %23 : vector<1xf32> to vector<1x1x1xf32>
    %25 = vector.extract %24[0, 0, 0] : f32 from vector<1x1x1xf32>
    %26 = vector.broadcast %25 : f32 to vector<1x8x128xf32>
    %c0_12 = arith.constant 0 : index
    %c0_13 = arith.constant 0 : index
    %c0_14 = arith.constant 0 : index
    %27 = vector.load %arg5[%c0_12, %c0_13, %c0_14] : memref<1x8x128xf32, #tpu.memory_space<vmem>>, vector<1x8x128xf32>
    tpu.vector_store %arg5[%c0_12, %c0_13, %c0_14], %26 {strides = array<i32>} : memref<1x8x128xf32, #tpu.memory_space<vmem>>, vector<1x8x128xf32>,
    return
  }
  func.func @transform_0(%arg0: i32) -> (i32, i32) {
    %c0_i32 = arith.constant 0 : i32
    %c0_i32_0 = arith.constant 0 : i32
    return %arg0, %c0_i32 : i32, i32
  }
  func.func @transform_1(%arg0: i32) -> (i32, i32) {
    %c0_i32 = arith.constant 0 : i32
    %c0_i32_0 = arith.constant 0 : i32
    return %arg0, %c0_i32 : i32, i32
  }
  func.func @transform_2(%arg0: i32) -> (i32, i32) {
    %c0_i32 = arith.constant 0 : i32
    %c0_i32_0 = arith.constant 0 : i32
    %c0_i32_1 = arith.constant 0 : i32
    return %c0_i32, %c0_i32_0 : i32, i32
  }
  func.func @transform_3(%arg0: i32) -> (i32, i32) {
    %c0_i32 = arith.constant 0 : i32
    %c0_i32_0 = arith.constant 0 : i32
    %c0_i32_1 = arith.constant 0 : i32
    return %c0_i32, %c0_i32_0 : i32, i32
  }
  func.func @transform_4(%arg0: i32) -> (i32, i32, i32) {
    %c0_i32 = arith.constant 0 : i32
    %c0_i32_0 = arith.constant 0 : i32
    %c0_i32_1 = arith.constant 0 : i32
    return %arg0, %c0_i32, %c0_i32_0 : i32, i32, i32
  }
}

</mosaic_0001>

<llo_original>
// kernel: tpu_custom_call.1
$region0: #{tpu_custom_call.1}
  #allocation0 [shape = 'u32[]', space=smem, size = 0x4, offset = 0x4, fixed_abs, tag = 'smem constant byte address 0x4 - core index']
  #allocation1 [shape = 'u32[144,128]{1,0:T(1,128)}', space=vmem, size = 0x12000, scoped, tag = 'internal scratch']
  %s0 = inlined_call_operand.hbm [shape: f32[1,128], index: 0, kind: input, shape index: {}]
  %s1 = inlined_call_operand.vmem [shape: f32[1,128], index: 1, kind: input, shape index: {}]
  %s2 = inlined_call_operand.vmem [shape: f32[1,128], index: 2, kind: input, shape index: {}]
  %s3 = inlined_call_operand.vmem [shape: f32[1,128], index: 3, kind: input, shape index: {}]
  %s4 = inlined_call_operand.hbm [shape: f32[1,8,128], index: 4, kind: output, shape index: {}]
  %s5 = sld [smem:[#allocation0]]
  $region30: #{tpu_custom_call.1} parent=0
    _
  %s7 = ssub.s32 1, %s5
  %s8 = scalar_select 0, %s7, %s5
  $region1: #{tpu_custom_call.1} parent=0
    #allocation2 [shape = 'u8[512]{0}', space=vmem, size = 0x400, scoped, tag = 'input window, operand 0, single buffered']
    #allocation3 [shape = 's32[1]{0}', space=sflag, size = 0x4, scoped, tag = 'scoped memory for tpu_custom_call.1']
    #allocation4 [shape = 's32[1]{0}', space=sflag, size = 0x4, scoped, tag = 'scoped memory for tpu_custom_call.1']
    #allocation5 [shape = 'u8[4096]{0}', space=vmem, size = 0x1000, scoped, tag = 'output window, operand 0, single buffered']
    %9 = vsyncpa [#allocation3], 0
    %10 = vsyncpa [#allocation4], 0
    // Predicated region
    $region2: #{tpu_custom_call.1} parent=1 // pred_check
      _
    $region3: #{tpu_custom_call.1} parent=1 // pred_check_branch
      %12 = sbr.rel (0) target = $region5
    $region4: #{tpu_custom_call.1} parent=1 // pred_region
      %s14 = ssub.s32 16, 16
      %15 = vsyncadd [#allocation3], %s14
      %s17 = sshll.u32 [#allocation2], 4
      %s18 = int_to_ptr.vmem [resolvable:$true] %s17
      %20 = dma.hbm_to_vmem [thread:$0]  %s0, 16, %s18, [#allocation3]
    $region5: #{tpu_custom_call.1} parent=1 // pred_fallthru
      _
    // Predicated region
    $region6: #{tpu_custom_call.1} parent=1 // pred_check
      _
    $region7: #{tpu_custom_call.1} parent=1 // pred_check_branch
      %22 = sbr.rel (0) target = $region9
    $region8: #{tpu_custom_call.1} parent=1 // pred_region
      _
    $region9: #{tpu_custom_call.1} parent=1 // pred_fallthru
      _
    // Predicated region
    $region10: #{tpu_custom_call.1} parent=1 // pred_check
      _
    $region11: #{tpu_custom_call.1} parent=1 // pred_check_branch
      %24 = sbr.rel (0) target = $region13
    $region12: #{tpu_custom_call.1} parent=1 // pred_region
      _
    $region13: #{tpu_custom_call.1} parent=1 // pred_fallthru
      _
    // Predicated region
    $region14: #{tpu_custom_call.1} parent=1 // pred_check
      _
    $region15: #{tpu_custom_call.1} parent=1 // pred_check_branch
      %26 = sbr.rel (0) target = $region17
    $region16: #{tpu_custom_call.1} parent=1 // pred_region
      _
    $region17: #{tpu_custom_call.1} parent=1 // pred_fallthru
      _
    // Predicated region
    $region18: #{tpu_custom_call.1} parent=1 // pred_check
      _
    $region19: #{tpu_custom_call.1} parent=1 // pred_check_branch
      %28 = sbr.rel (0) target = $region21
    $region20: #{tpu_custom_call.1} parent=1 // pred_region
      %29 = dma.done [#allocation3], 16
    $region21: #{tpu_custom_call.1} parent=1 // pred_fallthru
      _
    %v30 = vld [vmem:[#allocation2] sm:$0x1]
    %v31 = vld [vmem:[%s1] sm:$0x1]
    %v32 = vld [vmem:[%s2] sm:$0x1]
    %v33 = vld [vmem:[%s3] sm:$0x1]
    %vm34 = vcmp.eq.f32.partialorder %v31, 1.0
    %vm35 = vcmp.eq.f32.partialorder %v31, 0.0
    %v36 = vsel %vm35, %v32, 0.0
    %v37 = vsel %vm34, %v33, %v36
    %v38 = vmax.f32 %v30, 0.0
    %v39 = vmul.f32 %v30, %v31
    %v40 = vsub.f32 %v38, %v39
    %v41 = vand.u32 2147483647, %v30
    %v42 = vsub.f32 0.0, %v41
    %v43 = vmul.f32 %v42, 1.442695
    %v44 = vpow.pop %v43
    %v45 = vadd.f32 %v44, 1.0
    %v46 = vlog2.pop %v45
    %v47 = vmul.f32 %v46, 0.6931472
    %v48 = vmul.f32 -0.5, %v44
    %v49 = vadd.f32 %v48, 1.0
    %v50 = vmul.f32 %v49, %v44
    %v51 = vand.u32 2147483647, %v44
    %vm52 = vcmp.lt.f32.partialorder %v51, 0.0004427343
    %v53 = vsel %vm52, %v50, %v47
    %v54 = vadd.f32 %v40, %v53
    %v55 = vmul.f32 %v37, %v54
    %vm56 = vcmask 1040384
    %v57 = vsel %vm56, %v55, 0.0
    %58 = vadd.xlane.f32.xlu0 %v57
    %v59 = vpop.xlane.xlu0 %58
    %v60 = vrot.slane %v59, 4
    %v61 = vadd.f32 %v59, %v60
    %v62 = vrot.slane %v61, 2
    %v63 = vadd.f32 %v61, %v62
    %v64 = vrot.slane %v63, 1
    %v65 = vadd.f32 %v63, %v64
    %s66 = vtos %v65
    %v67 = vstv %s66
    %68 = vst [vmem:[#allocation5] sm:$0xff] %v67
    // Predicated region
    $region22: #{tpu_custom_call.1} parent=1 // pred_check
      _
    $region23: #{tpu_custom_call.1} parent=1 // pred_check_branch
      %70 = sbr.rel (0) target = $region25
    $region24: #{tpu_custom_call.1} parent=1 // pred_region
      %s72 = ssub.s32 128, 128
      %73 = vsyncadd [#allocation4], %s72
      %s75 = sshll.u32 [#allocation5], 4
      %s76 = int_to_ptr.vmem [resolvable:$true] %s75
      %78 = dma.vmem_to_hbm [thread:$0]  %s76, 128, %s4, [#allocation4]
    $region25: #{tpu_custom_call.1} parent=1 // pred_fallthru
      _
    // Predicated region
    $region26: #{tpu_custom_call.1} parent=1 // pred_check
      _
    $region27: #{tpu_custom_call.1} parent=1 // pred_check_branch
      %80 = sbr.rel (0) target = $region29
    $region28: #{tpu_custom_call.1} parent=1 // pred_region
      %81 = dma.done [#allocation4], 128
    $region29: #{tpu_custom_call.1} parent=1 // pred_fallthru
      _
    %82 = vsyncpa [#allocation3], 1
    %83 = vsyncpa [#allocation4], 1

</llo_original>
